<compile_context>
chip_gen: v6e
topology: v6e:2x2x1
jax: 0.10.0
libtpu: 0.0.40
codegen_flags: <defaults>
</compile_context>

<pallas_src>
import jax
import jax.numpy as jnp
from jax.experimental import pallas as pl
from jax.experimental.pallas import tpu as pltpu


def _sqrt_kernel(x_ref, o_ref):
    # Elementwise sqrt on the whole VMEM tile (EUP op; kernel is HBM-bound).
    o_ref[...] = jnp.sqrt(x_ref[...])


_LANE = 128
_WIDTH_CANDIDATES = (32768, 16384, 8192, 4096, 2048, 1024, 512, 256, 128)
_SINGLE_BLOCK_MAX_BYTES = 512 * 1024      # below this, pipelining cannot pay off
_VMEM_LIMIT_BYTES = 32 * 1024 * 1024      # <= physical VMEM on every generation


def _cdiv(a: int, b: int) -> int:
    return -(-a // b)


def _round_up(a: int, m: int) -> int:
    return _cdiv(a, m) * m


def _sublane_multiple(dtype) -> int:
    itemsize = jnp.dtype(dtype).itemsize
    return {4: 8, 2: 16, 1: 32}.get(itemsize, 8)


def _target_block_bytes() -> int:
    """Generation-aware per-block byte budget (one input OR one output block)."""
    block = 4 * 1024 * 1024  # v5e / v6e sweet spot (explicit vmem limit set below)
    try:
        info = pltpu.get_tpu_info()
        vmem_cap = getattr(info, "vmem_capacity_bytes", None)
        if vmem_cap is not None and vmem_cap <= 64 * 1024 * 1024:
            # v7x-class: 64 MiB VMEM, 3.2 TB/s HBM -> bigger blocks amortize the
            # ~0.35 us/step grid overhead.  6 MiB * 2 arrays * 2 buffers = 24 MiB.
            block = 6 * 1024 * 1024
    except Exception:
        pass
    return block


def _choose_width(total: int):
    """Widest multiple-of-128 last dim that divides `total` exactly (else None)."""
    for width in _WIDTH_CANDIDATES:
        if total % width == 0:
            return width
    return None


def _sqrt_2d(x2d: jax.Array, sublane: int) -> jax.Array:
    """Run the sqrt kernel on a lane-dense 2-D slab (rows, width)."""
    rows, width = x2d.shape
    dtype = x2d.dtype
    itemsize = jnp.dtype(dtype).itemsize
    total_bytes = rows * width * itemsize

    if total_bytes <= _SINGLE_BLOCK_MAX_BYTES or rows <= sublane:
        # Tiny/small input: one whole-array VMEM block, no grid/pipeline setup.
        # (block shape == full array dims is always legal.)
        return pl.pallas_call(
            _sqrt_kernel,
            out_shape=jax.ShapeDtypeStruct((rows, width), dtype),
        )(x2d)

    block_bytes = _target_block_bytes()
    tm_cap = (block_bytes // (width * itemsize)) // sublane * sublane
    tm_cap = max(sublane, tm_cap)
    # Guarantee >= 2 pipeline steps for medium inputs so DMA-in/compute/DMA-out
    # overlap; large inputs just use the full block-byte budget.
    tm = min(tm_cap, max(sublane, _round_up(_cdiv(rows, 2), sublane)))

    grid = (_cdiv(rows, tm),)  # ragged trailing row-block handled by Pallas
    return pl.pallas_call(
        _sqrt_kernel,
        out_shape=jax.ShapeDtypeStruct((rows, width), dtype),
        grid_spec=pltpu.PrefetchScalarGridSpec(
            num_scalar_prefetch=0,
            grid=grid,
            # TODO(synk): if xprof shows exposed input DMA on v7x, add
            # pipeline_mode=pl.Buffered(3) to this input BlockSpec.
            in_specs=[pl.BlockSpec((tm, width), lambda i: (i, 0))],
            out_specs=pl.BlockSpec((tm, width), lambda i: (i, 0)),
        ),
        compiler_params=pltpu.CompilerParams(
            dimension_semantics=("parallel",),   # megacore sharding on v7x
            vmem_limit_bytes=_VMEM_LIMIT_BYTES,  # lets 4-6 MiB blocks pass on v5e
        ),
    )(x2d)


def sqrt_pallas(x: jax.Array) -> jax.Array:
    """Elementwise sqrt matching torch.sqrt (integers promote to float32)."""
    orig_shape = x.shape
    out_dtype = x.dtype if jnp.issubdtype(x.dtype, jnp.floating) else jnp.float32
    x = x.astype(out_dtype)
    total = x.size

    if total == 0:
        return x.reshape(orig_shape)

    sublane = _sublane_multiple(out_dtype)
    x_flat = jnp.ravel(x)

    width = _choose_width(total)
    if width is not None:
        # Zero-copy lane-dense slab covering the whole array.
        y_flat = _sqrt_2d(x_flat.reshape(total // width, width), sublane).reshape(-1)
        return y_flat.reshape(orig_shape)

    # Ragged size (total not a multiple of 128): run the kernel on the aligned
    # prefix and compute the (< 128-element) tail with plain jnp.sqrt.  This
    # avoids the previous jnp.pad + slice (two extra full HBM passes).
    main_len = (total // _LANE) * _LANE
    if main_len == 0:
        # Fewer than 128 elements total: a single (1, total) full-array block.
        y_flat = _sqrt_2d(x_flat.reshape(1, total), sublane).reshape(-1)
        return y_flat.reshape(orig_shape)

    main = x_flat[:main_len]
    tail = x_flat[main_len:]
    width = _choose_width(main_len)  # main_len is a multiple of 128, so >= 128
    y_main = _sqrt_2d(main.reshape(main_len // width, width), sublane).reshape(-1)
    y_tail = jnp.sqrt(tail)
    y_flat = jnp.concatenate([y_main, y_tail])
    return y_flat.reshape(orig_shape)


if __name__ == "__main__":
    key = jax.random.PRNGKey(0)
    # NCHW input, non-negative (domain where torch.sqrt returns real values).
    x = jax.random.uniform(key, (2, 4, 16, 16), dtype=jnp.float32)

    y = jax.block_until_ready(sqrt_pallas(x))
    y_ref = jnp.sqrt(x)
    assert y.shape == x.shape and y.dtype == x.dtype
    assert jnp.allclose(y, y_ref, atol=1e-6, rtol=1e-6)

    # Exercise the gridded (pipelined) path.
    x_big = jax.random.uniform(jax.random.PRNGKey(1), (8, 256, 512), dtype=jnp.float32)
    y_big = jax.block_until_ready(sqrt_pallas(x_big))
    assert jnp.allclose(y_big, jnp.sqrt(x_big), atol=1e-6, rtol=1e-6)

    # Exercise the ragged prefix+tail path (no pad/slice passes).
    x_rag = jax.random.uniform(jax.random.PRNGKey(2), (5, 131), dtype=jnp.float32)
    y_rag = jax.block_until_ready(sqrt_pallas(x_rag))
    assert jnp.allclose(y_rag, jnp.sqrt(x_rag), atol=1e-6, rtol=1e-6)

    print("KERNEL_OK")
</pallas_src>

<mosaic_0001>
module attributes {stable_mosaic.version = 11 : i64} {
  func.func @_sqrt_kernel(%arg0: memref<1x2048xf32, #tpu.memory_space<vmem>>, %arg1: memref<1x2048xf32, #tpu.memory_space<vmem>>) attributes {dimension_semantics = [], scalar_prefetch = 0 : i64, scratch_operands = 0 : i64, tpu.core_type = #tpu.core_type<tc>} {
    %c0 = arith.constant 0 : index
    %c0_0 = arith.constant 0 : index
    %0 = vector.load %arg0[%c0, %c0_0] : memref<1x2048xf32, #tpu.memory_space<vmem>>, vector<1x2048xf32>
    %1 = math.sqrt %0 : vector<1x2048xf32>
    %c0_1 = arith.constant 0 : index
    %c0_2 = arith.constant 0 : index
    %2 = vector.load %arg1[%c0_1, %c0_2] : memref<1x2048xf32, #tpu.memory_space<vmem>>, vector<1x2048xf32>
    tpu.vector_store %arg1[%c0_1, %c0_2], %1 {strides = array<i32>} : memref<1x2048xf32, #tpu.memory_space<vmem>>, vector<1x2048xf32>,
    return
  }
}

</mosaic_0001>

<llo_original>
// kernel: tpu_custom_call.1
$region0: #{tpu_custom_call.1}
  #allocation0 [shape = 'u32[]', space=smem, size = 0x4, offset = 0x4, fixed_abs, tag = 'smem constant byte address 0x4 - core index']
  #allocation1 [shape = 'u32[144,128]{1,0:T(1,128)}', space=vmem, size = 0x12000, scoped, tag = 'internal scratch']
  %s0 = inlined_call_operand.hbm [shape: f32[1,2048], index: 0, kind: input, shape index: {}]
  %s1 = inlined_call_operand.hbm [shape: f32[1,2048], index: 1, kind: output, shape index: {}]
  %s2 = sld [smem:[#allocation0]]
  $region18: #{tpu_custom_call.1} parent=0
    _
  %s4 = ssub.s32 1, %s2
  %s5 = scalar_select 0, %s4, %s2
  $region1: #{tpu_custom_call.1} parent=0
    #allocation2 [shape = 'u8[8192]{0}', space=vmem, size = 0x2000, scoped, tag = 'input window, operand 0, single buffered']
    #allocation3 [shape = 's32[1]{0}', space=sflag, size = 0x4, scoped, tag = 'scoped memory for tpu_custom_call.1']
    #allocation4 [shape = 's32[1]{0}', space=sflag, size = 0x4, scoped, tag = 'scoped memory for tpu_custom_call.1']
    #allocation5 [shape = 'u8[8192]{0}', space=vmem, size = 0x2000, scoped, tag = 'output window, operand 0, single buffered']
    %6 = vsyncpa [#allocation3], 0
    %7 = vsyncpa [#allocation4], 0
    // Predicated region
    $region2: #{tpu_custom_call.1} parent=1 // pred_check
      _
    $region3: #{tpu_custom_call.1} parent=1 // pred_check_branch
      %9 = sbr.rel (0) target = $region5
    $region4: #{tpu_custom_call.1} parent=1 // pred_region
      %s11 = ssub.s32 256, 256
      %12 = vsyncadd [#allocation3], %s11
      %s14 = sshll.u32 [#allocation2], 4
      %s15 = int_to_ptr.vmem [resolvable:$true] %s14
      %17 = dma.hbm_to_vmem [thread:$0]  %s0, 256, %s15, [#allocation3]
    $region5: #{tpu_custom_call.1} parent=1 // pred_fallthru
      _
    // Predicated region
    $region6: #{tpu_custom_call.1} parent=1 // pred_check
      _
    $region7: #{tpu_custom_call.1} parent=1 // pred_check_branch
      %19 = sbr.rel (0) target = $region9
    $region8: #{tpu_custom_call.1} parent=1 // pred_region
      %20 = dma.done [#allocation3], 256
    $region9: #{tpu_custom_call.1} parent=1 // pred_fallthru
      _
    %v21 = vld [vmem:[#allocation2] sm:$0xff]
    %v22 = vld [vmem:[#allocation2 + $0x8] sm:$0xff]
    %v23 = vrsqrt.pop %v21
    %v24 = vmul.f32 %v21, %v23
    %vm25 = vcmp.eq.f32.partialorder %v21, inf
    %v26 = vsel %vm25, %v21, %v24
    %vm27 = vcmp.eq.f32.partialorder %v21, 0.0
    %v28 = vand.u32 %v21, 2147483648
    %v29 = vsel %vm27, %v28, %v26
    %v30 = vrsqrt.pop %v22
    %v31 = vmul.f32 %v22, %v30
    %vm32 = vcmp.eq.f32.partialorder %v22, inf
    %v33 = vsel %vm32, %v22, %v31
    %vm34 = vcmp.eq.f32.partialorder %v22, 0.0
    %v35 = vand.u32 %v22, 2147483648
    %v36 = vsel %vm34, %v35, %v33
    %37 = vst [vmem:[#allocation5] sm:$0xff] %v29
    %38 = vst [vmem:[#allocation5 + $0x8] sm:$0xff] %v36
    // Predicated region
    $region10: #{tpu_custom_call.1} parent=1 // pred_check
      _
    $region11: #{tpu_custom_call.1} parent=1 // pred_check_branch
      %40 = sbr.rel (0) target = $region13
    $region12: #{tpu_custom_call.1} parent=1 // pred_region
      %s42 = ssub.s32 256, 256
      %43 = vsyncadd [#allocation4], %s42
      %s45 = sshll.u32 [#allocation5], 4
      %s46 = int_to_ptr.vmem [resolvable:$true] %s45
      %48 = dma.vmem_to_hbm [thread:$0]  %s46, 256, %s1, [#allocation4]
    $region13: #{tpu_custom_call.1} parent=1 // pred_fallthru
      _
    // Predicated region
    $region14: #{tpu_custom_call.1} parent=1 // pred_check
      _
    $region15: #{tpu_custom_call.1} parent=1 // pred_check_branch
      %50 = sbr.rel (0) target = $region17
    $region16: #{tpu_custom_call.1} parent=1 // pred_region
      %51 = dma.done [#allocation4], 256
    $region17: #{tpu_custom_call.1} parent=1 // pred_fallthru
      _
    %52 = vsyncpa [#allocation3], 1
    %53 = vsyncpa [#allocation4], 1

</llo_original>
